<compile_context>
chip_gen: v7x
topology: tpu7x:2x2x1
jax: 0.10.0
libtpu: 0.0.40
codegen_flags: <defaults>
</compile_context>

<pallas_src>
import jax
import jax.numpy as jnp
from jax.experimental import pallas as pl
from jax.experimental.pallas import tpu as pltpu


# dtype itemsize (bytes) -> packed-sublane multiple (minimum legal tile rows).
_SUBLANE_MULT = {4: 8, 2: 16, 1: 32}


def _copy_kernel(x_ref, o_ref):
    # Identity forward: o = pretrained.forward(x) with no backbone defined.
    o_ref[...] = x_ref[...]


def _tpu_budgets():
    """Return (vmem_limit_bytes, per_tile_byte_budget), generation-aware."""
    try:
        vmem = pltpu.get_tpu_info().vmem_capacity_bytes
    except Exception:  # interpret mode / unknown chip
        vmem = 64 * 1024 * 1024
    if vmem >= 128 * 1024 * 1024:
        # v5e / v6e: 128 MiB physical VMEM -> bigger tiles, fewer grid steps.
        return 64 * 1024 * 1024, 8 * 1024 * 1024
    # v7x: 64 MiB physical VMEM -> conservative budget.
    return 32 * 1024 * 1024, 4 * 1024 * 1024


def _lane_dense_2d(total_elems, last_dim, sub_mult):
    """Pick a (rows, cols) factorization of the flat buffer with cols a
    multiple of 128 (lane dense, unmasked stores) and, when possible, rows a
    multiple of the dtype's packed-sublane count."""
    candidates = (8192, 4096, 2048, 1024, 512, 256, 128)
    for cols in candidates:
        if total_elems % cols == 0 and (total_elems // cols) % sub_mult == 0:
            return total_elems // cols, cols
    for cols in candidates:
        if total_elems % cols == 0:
            return total_elems // cols, cols
    # No multiple-of-128 factorization at all: keep the natural flatten.
    return total_elems // last_dim, last_dim


def _choose_tile_rows(rows, cols, itemsize, sub_mult, tile_budget, total_bytes):
    """Largest sublane-aligned row tile within the per-tile byte budget,
    capped so large tensors keep a multi-step grid (v7x dual-TC sharding)."""
    bytes_per_row = cols * itemsize
    budget_rows = tile_budget // bytes_per_row
    tile = max(sub_mult, (budget_rows // sub_mult) * sub_mult)
    if total_bytes >= 8 * 1024 * 1024:
        # Keep >= 4 grid steps so the "parallel" axis has work for both
        # TensorCores on v7x (neutral on single-TC v5e/v6e).
        quarter = max(sub_mult, (rows // 4) // sub_mult * sub_mult)
        tile = min(tile, quarter)
    if tile >= rows:
        # Whole array fits the per-tile budget: single full-extent block
        # (always a legal block shape, regardless of row alignment).
        return rows
    # tile < rows: multiple of sub_mult; ragged last tile is masked by Pallas.
    return tile


def _pallas_identity_copy(x):
    """Tiled, lane-dense Pallas identity copy of x (any shape/dtype)."""
    n_elems = x.size
    itemsize = jnp.dtype(x.dtype).itemsize
    sub_mult = _SUBLANE_MULT.get(itemsize, 8)
    vmem_limit, tile_budget = _tpu_budgets()

    rows, cols = _lane_dense_2d(n_elems, x.shape[-1], sub_mult)
    x2d = x.reshape(rows, cols)
    total_bytes = n_elems * itemsize
    tile_r = _choose_tile_rows(rows, cols, itemsize, sub_mult,
                               tile_budget, total_bytes)

    out2d = pl.pallas_call(
        _copy_kernel,
        out_shape=jax.ShapeDtypeStruct((rows, cols), x2d.dtype),
        grid=(pl.cdiv(rows, tile_r),),
        in_specs=[pl.BlockSpec((tile_r, cols), lambda i: (i, 0))],
        out_specs=pl.BlockSpec((tile_r, cols), lambda i: (i, 0)),
        # Zero-copy when the caller donates the input under jit.
        input_output_aliases={0: 0},
        cost_estimate=pl.CostEstimate(
            flops=0, transcendentals=0, bytes_accessed=2 * total_bytes),
        compiler_params=pltpu.CompilerParams(
            dimension_semantics=("parallel",),
            vmem_limit_bytes=vmem_limit,
        ),
    )(x2d)

    return out2d.reshape(x.shape)


def pose_skeleton_forward(x, run_kernel=False):
    """Forward pass of PoseSkeletonModel (delegating pass-through).

    By default this is the zero-cost identity (no kernel launch, no HBM
    traffic).  Set run_kernel=True to route through the Pallas identity-copy
    kernel (e.g. to keep an explicit custom-call boundary for profiling).
    """
    if run_kernel:
        return _pallas_identity_copy(x)
    return x


class PoseSkeletonModelPallas:
    """JAX/Pallas port of PoseSkeletonModel (delegating wrapper)."""

    def __init__(self, weights=None):
        # Mirrors the PyTorch __init__: no parameters are created.
        self.pretrained = None

    def forward(self, x, run_kernel=False):
        # Reference module calls self.pretrained.forward(x); with no backbone
        # specified the delegation reduces to an identity pass-through.
        return pose_skeleton_forward(x, run_kernel=run_kernel)


if __name__ == "__main__":
    key = jax.random.PRNGKey(0)
    # Small NCHW input consistent with an image-model forward: (2, 4, 16, 16).
    x = jax.random.normal(key, (2, 4, 16, 16), dtype=jnp.float32)

    model = PoseSkeletonModelPallas(weights=None)

    # Fast path: forward() is a free pass-through (the recommended default).
    y_fast = jax.block_until_ready(model.forward(x))

    # Kernel path: run the Pallas identity-copy kernel once to validate it.
    y_kernel = jax.block_until_ready(model.forward(x, run_kernel=True))

    assert y_fast.shape == x.shape and y_fast.dtype == x.dtype
    assert y_kernel.shape == x.shape and y_kernel.dtype == x.dtype
    assert bool(jnp.allclose(y_fast, x))
    assert bool(jnp.allclose(y_kernel, x))
    print("KERNEL_OK")
</pallas_src>

<mosaic_0001>
module attributes {stable_mosaic.version = 11 : i64} {
  func.func @_copy_kernel(%arg0: i32, %arg1: memref<8x256xf32, #tpu.memory_space<vmem>>, %arg2: memref<8x256xf32, #tpu.memory_space<vmem>>) attributes {dimension_semantics = [#tpu.dimension_semantics<parallel>], iteration_bounds = array<i64: 1>, scalar_prefetch = 0 : i64, scratch_operands = 0 : i64, tpu.core_type = #tpu.core_type<tc>, window_params = [{transform_indices = @transform_0, window_bounds = array<i64: 8, 256>}, {transform_indices = @transform_1, window_bounds = array<i64: 8, 256>}]} {
    %c0 = arith.constant 0 : index
    %c0_0 = arith.constant 0 : index
    %0 = vector.load %arg1[%c0, %c0_0] : memref<8x256xf32, #tpu.memory_space<vmem>>, vector<8x256xf32>
    %c0_1 = arith.constant 0 : index
    %c0_2 = arith.constant 0 : index
    %1 = vector.load %arg2[%c0_1, %c0_2] : memref<8x256xf32, #tpu.memory_space<vmem>>, vector<8x256xf32>
    tpu.vector_store %arg2[%c0_1, %c0_2], %0 {strides = array<i32>} : memref<8x256xf32, #tpu.memory_space<vmem>>, vector<8x256xf32>,
    return
  }
  func.func @transform_0(%arg0: i32) -> (i32, i32) {
    %c0_i32 = arith.constant 0 : i32
    %c0_i32_0 = arith.constant 0 : i32
    return %arg0, %c0_i32 : i32, i32
  }
  func.func @transform_1(%arg0: i32) -> (i32, i32) {
    %c0_i32 = arith.constant 0 : i32
    %c0_i32_0 = arith.constant 0 : i32
    return %arg0, %c0_i32 : i32, i32
  }
}

</mosaic_0001>

<llo_original>
// kernel: tpu_custom_call.1
$region0: #{tpu_custom_call.1}
  #allocation0 [shape = 'u32[]', space=smem, size = 0x4, offset = 0x4, fixed_abs, tag = 'smem constant byte address 0x4 - core index']
  #allocation1 [shape = 'u32[144,128]{1,0:T(1,128)}', space=vmem, size = 0x12000, scoped, tag = 'internal scratch']
  %s0 = inlined_call_operand.hbm [shape: f32[8,256], index: 0, kind: input, shape index: {}, may-alias: {0,1}]
  %s1 = inlined_call_operand.hbm [shape: f32[8,256], index: 1, kind: output, shape index: {}, may-alias: {0,1}]
  %s2 = sld [smem:[#allocation0]]
  $region18: #{tpu_custom_call.1} parent=0
    _
  %s4 = ssub.s32 1, %s2
  %s5 = scalar_select 0, %s4, %s2
  $region1: #{tpu_custom_call.1} parent=0
    #allocation2 [shape = 'u8[8192]{0}', space=vmem, size = 0x2000, scoped, tag = 'input window, operand 0, single buffered']
    #allocation3 [shape = 's32[1]{0}', space=sflag, size = 0x4, scoped, tag = 'scoped memory for tpu_custom_call.1']
    #allocation4 [shape = 's32[1]{0}', space=sflag, size = 0x4, scoped, tag = 'scoped memory for tpu_custom_call.1']
    #allocation5 [shape = 'u8[8192]{0}', space=vmem, size = 0x2000, scoped, tag = 'output window, operand 0, single buffered']
    %6 = vsyncpa [#allocation3], 0
    %7 = vsyncpa [#allocation4], 0
    // Predicated region
    $region2: #{tpu_custom_call.1} parent=1 // pred_check
      _
    $region3: #{tpu_custom_call.1} parent=1 // pred_check_branch
      %9 = sbr.rel (0) target = $region5
    $region4: #{tpu_custom_call.1} parent=1 // pred_region
      %s11 = ssub.s32 256, 256
      %12 = vsyncadd [#allocation3], %s11
      %s14 = sshll.u32 [#allocation2], 4
      %s15 = int_to_ptr.vmem [resolvable:$true] %s14
      %17 = dma.hbm_to_vmem [thread:$0]  %s0, 256, %s15, [#allocation3]
    $region5: #{tpu_custom_call.1} parent=1 // pred_fallthru
      _
    // Predicated region
    $region6: #{tpu_custom_call.1} parent=1 // pred_check
      _
    $region7: #{tpu_custom_call.1} parent=1 // pred_check_branch
      %19 = sbr.rel (0) target = $region9
    $region8: #{tpu_custom_call.1} parent=1 // pred_region
      %20 = dma.done [#allocation3], 256
    $region9: #{tpu_custom_call.1} parent=1 // pred_fallthru
      _
    %v21 = vld [vmem:[#allocation2] sm:$0xff]
    %v22 = vld [vmem:[#allocation2 + $0x8] sm:$0xff]
    %23 = vst [vmem:[#allocation5] sm:$0xff] %v21
    %24 = vst [vmem:[#allocation5 + $0x8] sm:$0xff] %v22
    // Predicated region
    $region10: #{tpu_custom_call.1} parent=1 // pred_check
      _
    $region11: #{tpu_custom_call.1} parent=1 // pred_check_branch
      %26 = sbr.rel (0) target = $region13
    $region12: #{tpu_custom_call.1} parent=1 // pred_region
      %s28 = ssub.s32 256, 256
      %29 = vsyncadd [#allocation4], %s28
      %s31 = sshll.u32 [#allocation5], 4
      %s32 = int_to_ptr.vmem [resolvable:$true] %s31
      %34 = dma.vmem_to_hbm [thread:$0]  %s32, 256, %s1, [#allocation4]
    $region13: #{tpu_custom_call.1} parent=1 // pred_fallthru
      _
    // Predicated region
    $region14: #{tpu_custom_call.1} parent=1 // pred_check
      _
    $region15: #{tpu_custom_call.1} parent=1 // pred_check_branch
      %36 = sbr.rel (0) target = $region17
    $region16: #{tpu_custom_call.1} parent=1 // pred_region
      %37 = dma.done [#allocation4], 256
    $region17: #{tpu_custom_call.1} parent=1 // pred_fallthru
      _
    %38 = vsyncpa [#allocation3], 1
    %39 = vsyncpa [#allocation4], 1

</llo_original>
